<compile_context>
chip_gen: v5e
topology: v5e:2x2
jax: 0.10.0
libtpu: 0.0.40
codegen_flags: <defaults>
</compile_context>

<pallas_src>
import jax
import jax.numpy as jnp
from jax.experimental import pallas as pl
from jax.experimental.pallas import tpu as pltpu


# ----------------------------------------------------------------------------
# Pallas kernel: batched Rodrigues -> component-major flattened 4x4 transforms.
#   out[c, b] = flat(T_joint[b])[c],  c in [0, 16)
# ----------------------------------------------------------------------------
def _rjoint_kernel(axis_ref, q_ref, out_ref):
    # axis components as SMEM scalars.
    ax = axis_ref[0]
    ay = axis_ref[1]
    az = axis_ref[2]
    nsq = ax * ax + ay * ay + az * az          # ||axis||^2  (scalar f32)

    q = q_ref[...]                             # (1, block_b)  lane-dense
    zero = jnp.zeros_like(q)
    one = jnp.ones_like(q)

    nsq_vec = jnp.maximum(zero + nsq, 1e-12)   # eps-guard against axis ~ 0
    theta = jnp.sqrt(nsq_vec)                  # (1, block_b)
    ang = q * theta
    s1 = jnp.sin(ang) / theta                  # sin(q*theta)/theta
    v1 = (1.0 - jnp.cos(ang)) / nsq_vec        # (1-cos(q*theta))/theta^2

    # R = I + s1*skew(axis) + v1*(axis axis^T - nsq*I), embedded in a 4x4 with zero
    # translation and [0,0,0,1] bottom row. Row-major flat index c -> out row c.
    out_ref[0:1, :] = one + v1 * (ax * ax - nsq)
    out_ref[1:2, :] = s1 * (-az) + v1 * (ax * ay)
    out_ref[2:3, :] = s1 * (ay) + v1 * (ax * az)
    out_ref[3:4, :] = zero                      # translation x
    out_ref[4:5, :] = s1 * (az) + v1 * (ay * ax)
    out_ref[5:6, :] = one + v1 * (ay * ay - nsq)
    out_ref[6:7, :] = s1 * (-ax) + v1 * (ay * az)
    out_ref[7:8, :] = zero                      # translation y
    out_ref[8:9, :] = s1 * (-ay) + v1 * (az * ax)
    out_ref[9:10, :] = s1 * (ax) + v1 * (az * ay)
    out_ref[10:11, :] = one + v1 * (az * az - nsq)
    out_ref[11:12, :] = zero                    # translation z
    out_ref[12:13, :] = zero                    # bottom row [0,0,0,1]
    out_ref[13:14, :] = zero
    out_ref[14:15, :] = zero
    out_ref[15:16, :] = one


# ----------------------------------------------------------------------------
# Plain-JAX helpers for the parameter-only T_offset (tiny 4x4, once per call).
# ----------------------------------------------------------------------------
def _skew(w):
    wx, wy, wz = w[0], w[1], w[2]
    zero = jnp.zeros(())
    return jnp.stack([
        jnp.stack([zero, -wz, wy]),
        jnp.stack([wz, zero, -wx]),
        jnp.stack([-wy, wx, zero]),
    ])


def _rpy2r(rpy):
    # R = Rz(yaw) @ Ry(pitch) @ Rx(roll)   (ZYX convention, as in PRIMNET pyart)
    r, p, y = rpy[0], rpy[1], rpy[2]
    cr, sr = jnp.cos(r), jnp.sin(r)
    cp, sp = jnp.cos(p), jnp.sin(p)
    cy, sy = jnp.cos(y), jnp.sin(y)
    return jnp.stack([
        jnp.stack([cy * cp, -sy * cr + cy * sp * sr, sy * sr + cy * sp * cr]),
        jnp.stack([sy * cp, cy * cr + sy * sp * sr, -cy * sr + sy * sp * cr]),
        jnp.stack([-sp, cp * sr, cp * cr]),
    ])


def _pr2t(p, R):
    top = jnp.concatenate([R, p], axis=1)
    bottom = jnp.array([[0.0, 0.0, 0.0, 1.0]], dtype=R.dtype)
    return jnp.concatenate([top, bottom], axis=0)


def _round_up(x, m):
    return ((x + m - 1) // m) * m


# ----------------------------------------------------------------------------
# Wrapper: Rjoint.forward
# ----------------------------------------------------------------------------
def rjoint_forward(q_value, p_offset, rpy_offset, axis):
    """Pallas-backed Rjoint.forward. q_value: (B,) f32.  Returns (T_offset, T_joint)."""
    q_value = q_value.astype(jnp.float32)
    B = q_value.shape[0]

    # --- T_offset: parameter-only (no batch) -> plain JAX glue -----------------
    T_offset = _pr2t(p_offset.astype(jnp.float32),
                     _rpy2r(rpy_offset.astype(jnp.float32)))

    # --- T_joint: batched Rodrigues in the Pallas kernel -----------------------
    LANE_BLOCK = 512                                   # lanes of batch per grid step
    Bp = max(_round_up(B, 128), 128)                   # lane-dense padded batch
    if Bp <= LANE_BLOCK:
        block_b = Bp
        num_blocks = 1
    else:
        block_b = LANE_BLOCK
        Bp = _round_up(Bp, LANE_BLOCK)
        num_blocks = Bp // block_b

    q_pad = jnp.zeros((1, Bp), jnp.float32).at[0, :B].set(q_value)
    axis_flat = axis.reshape(3).astype(jnp.float32)

    out = pl.pallas_call(
        _rjoint_kernel,
        out_shape=jax.ShapeDtypeStruct((16, Bp), jnp.float32),
        grid=(num_blocks,),
        in_specs=[
            pl.BlockSpec(memory_space=pltpu.MemorySpace.SMEM),    # axis (3,) scalars
            pl.BlockSpec((1, block_b), lambda i: (0, i)),          # q, lane-dense
        ],
        out_specs=pl.BlockSpec((16, block_b), lambda i: (0, i)),   # component-major slab
        compiler_params=pltpu.CompilerParams(
            dimension_semantics=("parallel",)),                    # shards across v7x's 2 TCs
    )(axis_flat, q_pad)

    # Layout plumbing back to torch's (B, 4, 4): transpose + reshape, drop pad.
    T_joint = out[:, :B].T.reshape(B, 4, 4)
    return T_offset, T_joint


if __name__ == "__main__":
    # Deterministic "parameter init" (mirrors nn.init.normal_ in __init__).
    p_offset_std = 0.1
    rpy_offset_std = 0.1
    B = 8

    key = jax.random.PRNGKey(0)
    k_p, k_rpy, k_axis, k_q, k_q2 = jax.random.split(key, 5)
    p_offset = jax.random.normal(k_p, (3, 1), jnp.float32) * p_offset_std
    rpy_offset = jax.random.normal(k_rpy, (3,), jnp.float32) * rpy_offset_std
    axis = jax.random.normal(k_axis, (3, 1), jnp.float32) * p_offset_std
    # q_layer (Linear motor_embed_dim -> 1, no bias) lives in get_q_value, not forward.
    q_value = jax.random.normal(k_q, (B,), jnp.float32)

    fwd = jax.jit(rjoint_forward)
    T_offset, T_joint = fwd(q_value, p_offset, rpy_offset, axis)
    jax.block_until_ready((T_offset, T_joint))

    # Pure-JAX reference of the batched Rodrigues path (original formulation).
    def ref_T_joint(q, ax):
        theta = jnp.sqrt(jnp.sum(ax ** 2))
        w = ax.reshape(3) / theta
        W = _skew(w)
        ang = q * theta
        R = (jnp.eye(3)[None]
             + jnp.sin(ang)[:, None, None] * W[None]
             + (1.0 - jnp.cos(ang))[:, None, None] * (W @ W)[None])
        T = jnp.tile(jnp.eye(4, dtype=jnp.float32)[None], (q.shape[0], 1, 1))
        return T.at[:, :3, :3].set(R)

    assert T_offset.shape == (4, 4) and T_joint.shape == (B, 4, 4)
    assert jnp.allclose(T_joint, ref_T_joint(q_value, axis), atol=1e-5), \
        "T_joint mismatch vs reference (small B)"

    # Larger batch, not a multiple of 8/128 -> exercises grid + tail padding.
    B2 = 1000
    q2 = jax.random.normal(k_q2, (B2,), jnp.float32)
    _, T_joint2 = fwd(q2, p_offset, rpy_offset, axis)
    jax.block_until_ready(T_joint2)
    assert T_joint2.shape == (B2, 4, 4)
    assert jnp.allclose(T_joint2, ref_T_joint(q2, axis), atol=1e-5), \
        "T_joint mismatch vs reference (large B)"

    print("KERNEL_OK")
</pallas_src>

<mosaic_0001>
module attributes {stable_mosaic.version = 11 : i64} {
  func.func @_rjoint_kernel(%arg0: i32, %arg1: memref<3xf32, #tpu.memory_space<smem>>, %arg2: memref<1x128xf32, #tpu.memory_space<vmem>>, %arg3: memref<16x128xf32, #tpu.memory_space<vmem>>) attributes {dimension_semantics = [#tpu.dimension_semantics<parallel>], iteration_bounds = array<i64: 1>, scalar_prefetch = 0 : i64, scratch_operands = 0 : i64, tpu.core_type = #tpu.core_type<tc>, window_params = [{transform_indices = @transform_0, window_bounds = array<i64: 3>}, {transform_indices = @transform_1, window_bounds = array<i64: 1, 128>}, {transform_indices = @transform_2, window_bounds = array<i64: 16, 128>}]} {
    %c0 = arith.constant 0 : index
    %0 = memref.load %arg1[%c0] : memref<3xf32, #tpu.memory_space<smem>>
    %c1 = arith.constant 1 : index
    %1 = memref.load %arg1[%c1] : memref<3xf32, #tpu.memory_space<smem>>
    %c2 = arith.constant 2 : index
    %2 = memref.load %arg1[%c2] : memref<3xf32, #tpu.memory_space<smem>>
    %3 = arith.mulf %0, %0 : f32
    %4 = arith.mulf %1, %1 : f32
    %5 = arith.addf %3, %4 : f32
    %6 = arith.mulf %2, %2 : f32
    %7 = arith.addf %5, %6 : f32
    %c0_0 = arith.constant 0 : index
    %c0_1 = arith.constant 0 : index
    %8 = vector.load %arg2[%c0_0, %c0_1] : memref<1x128xf32, #tpu.memory_space<vmem>>, vector<1x128xf32>
    %cst = arith.constant 0.000000e+00 : f32
    %9 = vector.broadcast %cst : f32 to vector<1x128xf32>
    %cst_2 = arith.constant 1.000000e+00 : f32
    %10 = vector.broadcast %cst_2 : f32 to vector<1x128xf32>
    %11 = vector.broadcast %7 : f32 to vector<1x128xf32>
    %12 = arith.addf %9, %11 : vector<1x128xf32>
    %cst_3 = arith.constant 9.99999996E-13 : f32
    %13 = vector.broadcast %cst_3 : f32 to vector<1x128xf32>
    %14 = arith.maximumf %12, %13 : vector<1x128xf32>
    %15 = math.sqrt %14 : vector<1x128xf32>
    %16 = arith.mulf %8, %15 : vector<1x128xf32>
    %17 = math.sin %16 : vector<1x128xf32>
    %18 = arith.divf %17, %15 : vector<1x128xf32>
    %19 = math.cos %16 : vector<1x128xf32>
    %cst_4 = arith.constant 1.000000e+00 : f32
    %20 = vector.broadcast %cst_4 : f32 to vector<1x128xf32>
    %21 = arith.subf %20, %19 : vector<1x128xf32>
    %22 = arith.divf %21, %14 : vector<1x128xf32>
    %23 = arith.mulf %0, %0 : f32
    %24 = arith.subf %23, %7 : f32
    %25 = vector.broadcast %24 : f32 to vector<1x128xf32>
    %26 = arith.mulf %22, %25 : vector<1x128xf32>
    %27 = arith.addf %10, %26 : vector<1x128xf32>
    %c0_5 = arith.constant 0 : index
    %c0_6 = arith.constant 0 : index
    %28 = vector.load %arg3[%c0_5, %c0_6] : memref<16x128xf32, #tpu.memory_space<vmem>>, vector<1x128xf32>
    tpu.vector_store %arg3[%c0_5, %c0_6], %27 {strides = array<i32>} : memref<16x128xf32, #tpu.memory_space<vmem>>, vector<1x128xf32>,
    %cst_7 = arith.constant 0.000000e+00 : f32
    %29 = arith.subf %cst_7, %2 : f32
    %30 = vector.broadcast %29 : f32 to vector<1x128xf32>
    %31 = arith.mulf %18, %30 : vector<1x128xf32>
    %32 = arith.mulf %0, %1 : f32
    %33 = vector.broadcast %32 : f32 to vector<1x128xf32>
    %34 = arith.mulf %22, %33 : vector<1x128xf32>
    %35 = arith.addf %31, %34 : vector<1x128xf32>
    %c1_8 = arith.constant 1 : index
    %c0_9 = arith.constant 0 : index
    %36 = vector.load %arg3[%c1_8, %c0_9] : memref<16x128xf32, #tpu.memory_space<vmem>>, vector<1x128xf32>
    tpu.vector_store %arg3[%c1_8, %c0_9], %35 {strides = array<i32>} : memref<16x128xf32, #tpu.memory_space<vmem>>, vector<1x128xf32>,
    %37 = vector.broadcast %1 : f32 to vector<1x128xf32>
    %38 = arith.mulf %18, %37 : vector<1x128xf32>
    %39 = arith.mulf %0, %2 : f32
    %40 = vector.broadcast %39 : f32 to vector<1x128xf32>
    %41 = arith.mulf %22, %40 : vector<1x128xf32>
    %42 = arith.addf %38, %41 : vector<1x128xf32>
    %c2_10 = arith.constant 2 : index
    %c0_11 = arith.constant 0 : index
    %43 = vector.load %arg3[%c2_10, %c0_11] : memref<16x128xf32, #tpu.memory_space<vmem>>, vector<1x128xf32>
    tpu.vector_store %arg3[%c2_10, %c0_11], %42 {strides = array<i32>} : memref<16x128xf32, #tpu.memory_space<vmem>>, vector<1x128xf32>,
    %c3 = arith.constant 3 : index
    %c0_12 = arith.constant 0 : index
    %44 = vector.load %arg3[%c3, %c0_12] : memref<16x128xf32, #tpu.memory_space<vmem>>, vector<1x128xf32>
    tpu.vector_store %arg3[%c3, %c0_12], %9 {strides = array<i32>} : memref<16x128xf32, #tpu.memory_space<vmem>>, vector<1x128xf32>,
    %45 = vector.broadcast %2 : f32 to vector<1x128xf32>
    %46 = arith.mulf %18, %45 : vector<1x128xf32>
    %47 = arith.mulf %1, %0 : f32
    %48 = vector.broadcast %47 : f32 to vector<1x128xf32>
    %49 = arith.mulf %22, %48 : vector<1x128xf32>
    %50 = arith.addf %46, %49 : vector<1x128xf32>
    %c4 = arith.constant 4 : index
    %c0_13 = arith.constant 0 : index
    %51 = vector.load %arg3[%c4, %c0_13] : memref<16x128xf32, #tpu.memory_space<vmem>>, vector<1x128xf32>
    tpu.vector_store %arg3[%c4, %c0_13], %50 {strides = array<i32>} : memref<16x128xf32, #tpu.memory_space<vmem>>, vector<1x128xf32>,
    %52 = arith.mulf %1, %1 : f32
    %53 = arith.subf %52, %7 : f32
    %54 = vector.broadcast %53 : f32 to vector<1x128xf32>
    %55 = arith.mulf %22, %54 : vector<1x128xf32>
    %56 = arith.addf %10, %55 : vector<1x128xf32>
    %c5 = arith.constant 5 : index
    %c0_14 = arith.constant 0 : index
    %57 = vector.load %arg3[%c5, %c0_14] : memref<16x128xf32, #tpu.memory_space<vmem>>, vector<1x128xf32>
    tpu.vector_store %arg3[%c5, %c0_14], %56 {strides = array<i32>} : memref<16x128xf32, #tpu.memory_space<vmem>>, vector<1x128xf32>,
    %cst_15 = arith.constant 0.000000e+00 : f32
    %58 = arith.subf %cst_15, %0 : f32
    %59 = vector.broadcast %58 : f32 to vector<1x128xf32>
    %60 = arith.mulf %18, %59 : vector<1x128xf32>
    %61 = arith.mulf %1, %2 : f32
    %62 = vector.broadcast %61 : f32 to vector<1x128xf32>
    %63 = arith.mulf %22, %62 : vector<1x128xf32>
    %64 = arith.addf %60, %63 : vector<1x128xf32>
    %c6 = arith.constant 6 : index
    %c0_16 = arith.constant 0 : index
    %65 = vector.load %arg3[%c6, %c0_16] : memref<16x128xf32, #tpu.memory_space<vmem>>, vector<1x128xf32>
    tpu.vector_store %arg3[%c6, %c0_16], %64 {strides = array<i32>} : memref<16x128xf32, #tpu.memory_space<vmem>>, vector<1x128xf32>,
    %c7 = arith.constant 7 : index
    %c0_17 = arith.constant 0 : index
    %66 = vector.load %arg3[%c7, %c0_17] : memref<16x128xf32, #tpu.memory_space<vmem>>, vector<1x128xf32>
    tpu.vector_store %arg3[%c7, %c0_17], %9 {strides = array<i32>} : memref<16x128xf32, #tpu.memory_space<vmem>>, vector<1x128xf32>,
    %cst_18 = arith.constant 0.000000e+00 : f32
    %67 = arith.subf %cst_18, %1 : f32
    %68 = vector.broadcast %67 : f32 to vector<1x128xf32>
    %69 = arith.mulf %18, %68 : vector<1x128xf32>
    %70 = arith.mulf %2, %0 : f32
    %71 = vector.broadcast %70 : f32 to vector<1x128xf32>
    %72 = arith.mulf %22, %71 : vector<1x128xf32>
    %73 = arith.addf %69, %72 : vector<1x128xf32>
    %c8 = arith.constant 8 : index
    %c0_19 = arith.constant 0 : index
    %74 = vector.load %arg3[%c8, %c0_19] : memref<16x128xf32, #tpu.memory_space<vmem>>, vector<1x128xf32>
    tpu.vector_store %arg3[%c8, %c0_19], %73 {strides = array<i32>} : memref<16x128xf32, #tpu.memory_space<vmem>>, vector<1x128xf32>,
    %75 = vector.broadcast %0 : f32 to vector<1x128xf32>
    %76 = arith.mulf %18, %75 : vector<1x128xf32>
    %77 = arith.mulf %2, %1 : f32
    %78 = vector.broadcast %77 : f32 to vector<1x128xf32>
    %79 = arith.mulf %22, %78 : vector<1x128xf32>
    %80 = arith.addf %76, %79 : vector<1x128xf32>
    %c9 = arith.constant 9 : index
    %c0_20 = arith.constant 0 : index
    %81 = vector.load %arg3[%c9, %c0_20] : memref<16x128xf32, #tpu.memory_space<vmem>>, vector<1x128xf32>
    tpu.vector_store %arg3[%c9, %c0_20], %80 {strides = array<i32>} : memref<16x128xf32, #tpu.memory_space<vmem>>, vector<1x128xf32>,
    %82 = arith.mulf %2, %2 : f32
    %83 = arith.subf %82, %7 : f32
    %84 = vector.broadcast %83 : f32 to vector<1x128xf32>
    %85 = arith.mulf %22, %84 : vector<1x128xf32>
    %86 = arith.addf %10, %85 : vector<1x128xf32>
    %c10 = arith.constant 10 : index
    %c0_21 = arith.constant 0 : index
    %87 = vector.load %arg3[%c10, %c0_21] : memref<16x128xf32, #tpu.memory_space<vmem>>, vector<1x128xf32>
    tpu.vector_store %arg3[%c10, %c0_21], %86 {strides = array<i32>} : memref<16x128xf32, #tpu.memory_space<vmem>>, vector<1x128xf32>,
    %c11 = arith.constant 11 : index
    %c0_22 = arith.constant 0 : index
    %88 = vector.load %arg3[%c11, %c0_22] : memref<16x128xf32, #tpu.memory_space<vmem>>, vector<1x128xf32>
    tpu.vector_store %arg3[%c11, %c0_22], %9 {strides = array<i32>} : memref<16x128xf32, #tpu.memory_space<vmem>>, vector<1x128xf32>,
    %c12 = arith.constant 12 : index
    %c0_23 = arith.constant 0 : index
    %89 = vector.load %arg3[%c12, %c0_23] : memref<16x128xf32, #tpu.memory_space<vmem>>, vector<1x128xf32>
    tpu.vector_store %arg3[%c12, %c0_23], %9 {strides = array<i32>} : memref<16x128xf32, #tpu.memory_space<vmem>>, vector<1x128xf32>,
    %c13 = arith.constant 13 : index
    %c0_24 = arith.constant 0 : index
    %90 = vector.load %arg3[%c13, %c0_24] : memref<16x128xf32, #tpu.memory_space<vmem>>, vector<1x128xf32>
    tpu.vector_store %arg3[%c13, %c0_24], %9 {strides = array<i32>} : memref<16x128xf32, #tpu.memory_space<vmem>>, vector<1x128xf32>,
    %c14 = arith.constant 14 : index
    %c0_25 = arith.constant 0 : index
    %91 = vector.load %arg3[%c14, %c0_25] : memref<16x128xf32, #tpu.memory_space<vmem>>, vector<1x128xf32>
    tpu.vector_store %arg3[%c14, %c0_25], %9 {strides = array<i32>} : memref<16x128xf32, #tpu.memory_space<vmem>>, vector<1x128xf32>,
    %c15 = arith.constant 15 : index
    %c0_26 = arith.constant 0 : index
    %92 = vector.load %arg3[%c15, %c0_26] : memref<16x128xf32, #tpu.memory_space<vmem>>, vector<1x128xf32>
    tpu.vector_store %arg3[%c15, %c0_26], %10 {strides = array<i32>} : memref<16x128xf32, #tpu.memory_space<vmem>>, vector<1x128xf32>,
    return
  }
  func.func @transform_0(%arg0: i32) -> i32 {
    %c0_i32 = arith.constant 0 : i32
    %c0_i32_0 = arith.constant 0 : i32
    return %c0_i32 : i32
  }
  func.func @transform_1(%arg0: i32) -> (i32, i32) {
    %c0_i32 = arith.constant 0 : i32
    %c0_i32_0 = arith.constant 0 : i32
    return %c0_i32, %arg0 : i32, i32
  }
  func.func @transform_2(%arg0: i32) -> (i32, i32) {
    %c0_i32 = arith.constant 0 : i32
    %c0_i32_0 = arith.constant 0 : i32
    return %c0_i32, %arg0 : i32, i32
  }
}

</mosaic_0001>

<llo_original>
// kernel: rjoint_forward.1
$region0: #{rjoint_forward.1}
  #allocation0 [shape = 'u32[]', space=smem, size = 0x4, offset = 0x4, fixed_abs, tag = 'smem constant byte address 0x4 - core index']
  #allocation1 [shape = 'u32[72,128]{1,0:T(1,128)}', space=vmem, size = 0x9000, scoped, tag = 'internal scratch']
  %s0 = inlined_call_operand.vmem [shape: f32[3], index: 0, kind: input, shape index: {}]
  %s1 = inlined_call_operand.vmem [shape: f32[1,128], index: 1, kind: input, shape index: {}]
  %s2 = inlined_call_operand.hbm [shape: f32[16,128], index: 2, kind: output, shape index: {}]
  %s3 = sld [smem:[#allocation0]]
  $region22: #{rjoint_forward.1} parent=0
    _
  %s5 = ssub.s32 1, %s3
  %s6 = scalar_select 0, %s5, %s3
  $region1: #{rjoint_forward.1} parent=0
    #allocation2 [shape = 'u8[512]{0}', space=smem, size = 0x200, scoped, tag = 'input window, operand 0, single buffered']
    #allocation3 [shape = 's32[1]{0}', space=sflag, size = 0x4, scoped, tag = 'scoped memory for rjoint_forward.1']
    #allocation4 [shape = 's32[1]{0}', space=sflag, size = 0x4, scoped, tag = 'scoped memory for rjoint_forward.1']
    #allocation5 [shape = 'u8[8192]{0}', space=vmem, size = 0x2000, scoped, tag = 'output window, operand 0, single buffered']
    %7 = vsyncpa [#allocation4], 0
    %8 = vsyncpa [#allocation3], 0
    // Predicated region
    $region2: #{rjoint_forward.1} parent=1 // pred_check
      _
    $region3: #{rjoint_forward.1} parent=1 // pred_check_branch
      %10 = sbr.rel (0) target = $region5
    $region4: #{rjoint_forward.1} parent=1 // pred_region
      %12 = vsyncadd [#allocation4], 0
      %s14 = sshll.u32 %s0, 4
      %s15 = int_to_ptr.vmem [resolvable:$true] %s14
      %17 = dma.vmem_to_smem %s15, 16, [#allocation2], [#allocation4]
    $region5: #{rjoint_forward.1} parent=1 // pred_fallthru
      _
    // Predicated region
    $region6: #{rjoint_forward.1} parent=1 // pred_check
      _
    $region7: #{rjoint_forward.1} parent=1 // pred_check_branch
      %19 = sbr.rel (0) target = $region9
    $region8: #{rjoint_forward.1} parent=1 // pred_region
      _
    $region9: #{rjoint_forward.1} parent=1 // pred_fallthru
      _
    // Predicated region
    $region10: #{rjoint_forward.1} parent=1 // pred_check
      _
    $region11: #{rjoint_forward.1} parent=1 // pred_check_branch
      %21 = sbr.rel (0) target = $region13
    $region12: #{rjoint_forward.1} parent=1 // pred_region
      %23 = dma.done [#allocation4], 16
    $region13: #{rjoint_forward.1} parent=1 // pred_fallthru
      _
    %24 = sfence
    %s25 = sld [smem:[#allocation2]]
    %s26 = sld [smem:[#allocation2 + $0x1]]
    %s27 = sld [smem:[#allocation2 + $0x2]]
    %s28 = smul.f32 %s25, %s25
    %s29 = smul.f32 %s26, %s26
    %s30 = sadd.f32 %s28, %s29
    %s31 = smul.f32 %s27, %s27
    %s32 = sadd.f32 %s30, %s31
    %v33 = vld [vmem:[%s1] sm:$0x1]
    %v34 = vstv %s32
    %v35 = vadd.f32 %v34, 0.0
    %v36 = vmax.f32 %v35, 1e-12
    %v37 = vrsqrt.pop %v36
    %v38 = vmul.f32 %v37, %v36
    %v39 = vmul.f32 %v38, %v37
    %v40 = vmul.f32 0.5, %v39
    %v41 = vsub.f32 1.5, %v40
    %v42 = vmul.f32 %v37, %v41
    %v43 = vmul.f32 %v36, %v42
    %vm44 = vcmp.eq.f32.partialorder %v36, inf
    %v45 = vsel %vm44, %v36, %v43
    %vm46 = vcmp.eq.f32.partialorder %v36, 0.0
    %v47 = vand.u32 %v36, 2147483648
    %v48 = vsel %vm46, %v47, %v45
    %v49 = vmul.f32 %v33, %v48
    %v50 = vand.u32 2147483647, %v49
    %vm51 = vcmp.le.f32.partialorder %v50, 0.7853982
    %vm52 = vcmp.lt.s32.totalorder %v49, 0
    %v53 = vand.u32 %v49, 2139095040
    %v54 = vshrl.u32 %v53, 23
    %v55 = vsub.s32 %v54, 127
    %v56 = vand.u32 2147483647, %v49
    %v57 = vand.u32 %v56, 8388607
    %v58 = vor.u32 %v57, 8388608
    %v59 = vsub.s32 0, %v58
    %v60 = vadd.s32 %v55, 1
    %vm61 = vcmp.gt.s32.totalorder %v60, 0
    %v62 = vsel %vm61, %v60, 0
    %v63 = vshrl.u32 %v62, 5
    %v64 = vand.u32 %v62, 31
    %v65 = vsub.s32 32, %v64
    %v66 = vshrl.u32 683565275, %v65
    %v67 = vshll.u32 683565275, %v64
    %v68 = vshrl.u32 2475754826, %v65
    %v69 = vor.u32 %v67, %v68
    %v70 = vshll.u32 2475754826, %v64
    %v71 = vshrl.u32 2131351028, %v65
    %v72 = vor.u32 %v70, %v71
    %v73 = vshll.u32 2131351028, %v64
    %v74 = vshrl.u32 2102212464, %v65
    %v75 = vor.u32 %v73, %v74
    %v76 = vshll.u32 2102212464, %v64
    %v77 = vshrl.u32 920167782, %v65
    %v78 = vor.u32 %v76, %v77
    %v79 = vshll.u32 920167782, %v64
    %v80 = vshrl.u32 1326507024, %v65
    %v81 = vor.u32 %v79, %v80
    %vm82 = vcmp.lt.s32.totalorder %v63, 1
    %vm83 = vcmp.lt.s32.totalorder %v63, 2
    %vm84 = vcmp.lt.s32.totalorder %v63, 3
    %vm85 = vcmp.lt.s32.totalorder %v63, 4
    %v86 = vsel %vm82, %v66, %v69
    %v87 = vsel %vm85, %v75, 2102212464
    %v88 = vsel %vm84, %v72, %v87
    %v89 = vsel %vm83, %v86, %v88
    %v90 = vsel %vm82, %v69, %v72
    %v91 = vsel %vm85, %v78, 920167782
    %v92 = vsel %vm84, %v75, %v91
    %v93 = vsel %vm83, %v90, %v92
    %v94 = vsel %vm82, %v72, %v75
    %v95 = vsel %vm85, %v81, 1326507024
    %v96 = vsel %vm84, %v78, %v95
    %v97 = vsel %vm83, %v94, %v96
    %v98 = vshll.u32 %v58, 8
    %v99 = vand.u32 %v98, 65535
    %v100 = vshrl.u32 %v98, 16
    %v101 = vand.u32 %v97, 65535
    %v102 = vshrl.u32 %v97, 16
    %v103 = vmul.u32 %v99, %v101
    %v104 = vmul.u32 %v99, %v102
    %v105 = vmul.u32 %v100, %v101
    %v106 = vmul.u32 %v100, %v102
    %v107 = vshll.u32 %v104, 16
    %v108 = vshrl.u32 %v104, 16
    %v109 = vshll.u32 %v105, 16
    %v110 = vshrl.u32 %v105, 16
    %vm111 = vc.u32 %v103, %v107
    %v112 = vsel %vm111, 1, 0
    %v113 = vadd.s32 %v103, %v107
    %v114 = vadd.s32 %v106, %v112
    %vm115 = vc.u32 %v113, %v109
    %v116 = vsel %vm115, 1, 0
    %v117 = vadd.s32 %v113, %v109
    %v118 = vadd.s32 %v114, %v116
    %v119 = vadd.s32 %v118, %v108
    %v120 = vadd.s32 %v119, %v110
    %v121 = vand.u32 %v98, 65535
    %v122 = vshrl.u32 %v98, 16
    %v123 = vand.u32 %v93, 65535
    %v124 = vshrl.u32 %v93, 16
    %v125 = vmul.u32 %v121, %v123
    %v126 = vmul.u32 %v121, %v124
    %v127 = vmul.u32 %v122, %v123
    %v128 = vmul.u32 %v122, %v124
    %v129 = vshll.u32 %v126, 16
    %v130 = vshrl.u32 %v126, 16
    %v131 = vshll.u32 %v127, 16
    %v132 = vshrl.u32 %v127, 16
    %vm133 = vc.u32 %v125, %v129
    %v134 = vsel %vm133, 1, 0
    %v135 = vadd.s32 %v125, %v129
    %v136 = vadd.s32 %v128, %v134
    %vm137 = vc.u32 %v135, %v131
    %v138 = vsel %vm137, 1, 0
    %v139 = vadd.s32 %v135, %v131
    %v140 = vadd.s32 %v136, %v138
    %v141 = vadd.s32 %v140, %v130
    %v142 = vadd.s32 %v141, %v132
    %v143 = vmul.u32 %v98, %v89
    %v144 = vadd.s32 %v120, %v139
    %vm145 = vc.u32 %v120, %v139
    %v146 = vadd.s32 %v142, 1
    %v147 = vsel %vm145, %v146, %v142
    %v148 = vadd.s32 %v143, %v147
    %v149 = vadd.s32 %v148, 536870912
    %v150 = vshrl.u32 %v149, 30
    %v151 = vshll.u32 %v150, 30
    %v152 = vsub.s32 %v148, %v151
    %vm153 = vcmp.lt.s32.totalorder %v152, 0
    %v154 = vsub.s32 0, %v152
    %v155 = vsel %vm153, %v154, %v152
    %v156 = vclz %v155
    %v157 = vsub.s32 %v156, 2
    %vm158 = vcmp.gt.s32.totalorder 0, %v157
    %v159 = vsel %vm158, 0, %v157
    %v160 = vsub.s32 32, %v159
    %v161 = vshll.u32 %v152, %v159
    %v162 = vshrl.u32 %v144, %v160
    %v163 = vor.u32 %v161, %v162
    %v164 = vsub.s32 4294967266, %v159
    %v165 = vadd.s32 %v164, 127
    %v166 = vshll.u32 %v165, 23
    %v167 = vor.u32 4788187, %v166
    %v168 = vand.u32 2147483647, %v167
    %v170 = vcvt.s32.f32 %v163
    %v171 = vmul.f32 %v170, %v168
    %v172 = vxor.u32 %v171, 2147483648
    %v173 = vsel %vm52, %v172, %v171
    %v174 = vsub.s32 4, %v150
    %v175 = vsel %vm52, %v174, %v150
    %v176 = vsel %vm51, %v49, %v173
    %v177 = vsel %vm51, 0, %v175
    %v178 = vmul.f32 %v176, %v176
    %v179 = vmul.f32 %v178, -0.001358992
    %v180 = vadd.f32 %v179, 0.041655596
    %v181 = vmul.f32 %v178, %v180
    %v182 = vadd.f32 %v181, -0.4999988
    %v183 = vmul.f32 %v178, %v182
    %v184 = vadd.f32 1.0, %v183
    %v185 = vmul.f32 %v176, %v176
    %v186 = vmul.f32 %v185, -0.00019511016
    %v187 = vadd.f32 %v186, 0.008332121
    %v188 = vmul.f32 %v185, %v187
    %v189 = vadd.f32 %v188, -0.16666654
    %v190 = vmul.f32 %v185, %v189
    %v191 = vadd.f32 %v190, 1.0
    %v192 = vmul.f32 %v191, %v176
    %vm193 = vweird.f32 %v49
    %v194 = vadd.s32 %v177, 3
    %v195 = vand.u32 %v194, 3
    %vm196 = vcmp.lt.s32.totalorder %v195, 2
    %vm197 = vcmp.eq.s32.totalorder %v195, 0
    %v198 = vxor.u32 %v192, 2147483648
    %v199 = vsel %vm197, %v184, %v198
    %vm200 = vcmp.eq.s32.totalorder %v195, 2
    %v201 = vxor.u32 %v184, 2147483648
    %v202 = vsel %vm200, %v201, %v192
    %v203 = vsel %vm196, %v199, %v202
    %v204 = vsel %vm193, nan, %v203
    %v205 = vrcp.pop %v48
    %v206 = vmul.f32 %v48, %v205
    %v207 = vsub.f32 1.0, %v206
    %v208 = vmul.f32 %v205, %v207
    %v209 = vadd.f32 %v205, %v208
    %vm210 = vweird.f32 %v48
    %vm211 = vweird.f32 %v205
    %vm212 = vmor %vm210, %vm211
    %v213 = vsel %vm212, %v205, %v209
    %v214 = vand.u32 2147483647, %v48
    %vm215 = vcmp.eq.f32.partialorder %v214, 8.507059e+37
    %v216 = vand.u32 %v48, 2147483648
    %v217 = vor.u32 1.1754944e-38, %v216
    %v218 = vsel %vm215, %v217, %v213
    %v219 = vmul.f32 %v204, %v218
    %v220 = vand.u32 2147483647, %v49
    %vm221 = vcmp.le.f32.partialorder %v220, 0.7853982
    %vm222 = vcmp.lt.s32.totalorder %v49, 0
    %v223 = vand.u32 %v49, 2139095040
    %v224 = vshrl.u32 %v223, 23
    %v225 = vsub.s32 %v224, 127
    %v226 = vand.u32 2147483647, %v49
    %v227 = vand.u32 %v226, 8388607
    %v228 = vor.u32 %v227, 8388608
    %v229 = vsub.s32 0, %v228
    %v230 = vadd.s32 %v225, 1
    %vm231 = vcmp.gt.s32.totalorder %v230, 0
    %v232 = vsel %vm231, %v230, 0
    %v233 = vshrl.u32 %v232, 5
    %v234 = vand.u32 %v232, 31
    %v235 = vsub.s32 32, %v234
    %v236 = vshrl.u32 683565275, %v235
    %v237 = vshll.u32 683565275, %v234
    %v238 = vshrl.u32 2475754826, %v235
    %v239 = vor.u32 %v237, %v238
    %v240 = vshll.u32 2475754826, %v234
    %v241 = vshrl.u32 2131351028, %v235
    %v242 = vor.u32 %v240, %v241
    %v243 = vshll.u32 2131351028, %v234
    %v244 = vshrl.u32 2102212464, %v235
    %v245 = vor.u32 %v243, %v244
    %v246 = vshll.u32 2102212464, %v234
    %v247 = vshrl.u32 920167782, %v235
    %v248 = vor.u32 %v246, %v247
    %v249 = vshll.u32 920167782, %v234
    %v250 = vshrl.u32 1326507024, %v235
    %v251 = vor.u32 %v249, %v250
    %vm252 = vcmp.lt.s32.totalorder %v233, 1
    %vm253 = vcmp.lt.s32.totalorder %v233, 2
    %vm254 = vcmp.lt.s32.totalorder %v233, 3
    %vm255 = vcmp.lt.s32.totalorder %v233, 4
    %v256 = vsel %vm252, %v236, %v239
    %v257 = vsel %vm255, %v245, 2102212464
    %v258 = vsel %vm254, %v242, %v257
    %v259 = vsel %vm253, %v256, %v258
    %v260 = vsel %vm252, %v239, %v242
    %v261 = vsel %vm255, %v248, 920167782
    %v262 = vsel %vm254, %v245, %v261
    %v263 = vsel %vm253, %v260, %v262
    %v264 = vsel %vm252, %v242, %v245
    %v265 = vsel %vm255, %v251, 1326507024
    %v266 = vsel %vm254, %v248, %v265
    %v267 = vsel %vm253, %v264, %v266
    %v268 = vshll.u32 %v228, 8
    %v269 = vand.u32 %v268, 65535
    %v270 = vshrl.u32 %v268, 16
    %v271 = vand.u32 %v267, 65535
    %v272 = vshrl.u32 %v267, 16
    %v273 = vmul.u32 %v269, %v271
    %v274 = vmul.u32 %v269, %v272
    %v275 = vmul.u32 %v270, %v271
    %v276 = vmul.u32 %v270, %v272
    %v277 = vshll.u32 %v274, 16
    %v278 = vshrl.u32 %v274, 16
    %v279 = vshll.u32 %v275, 16
    %v280 = vshrl.u32 %v275, 16
    %vm281 = vc.u32 %v273, %v277
    %v282 = vsel %vm281, 1, 0
    %v283 = vadd.s32 %v273, %v277
    %v284 = vadd.s32 %v276, %v282
    %vm285 = vc.u32 %v283, %v279
    %v286 = vsel %vm285, 1, 0
    %v287 = vadd.s32 %v283, %v279
    %v288 = vadd.s32 %v284, %v286
    %v289 = vadd.s32 %v288, %v278
    %v290 = vadd.s32 %v289, %v280
    %v291 = vand.u32 %v268, 65535
    %v292 = vshrl.u32 %v268, 16
    %v293 = vand.u32 %v263, 65535
    %v294 = vshrl.u32 %v263, 16
    %v295 = vmul.u32 %v291, %v293
    %v296 = vmul.u32 %v291, %v294
    %v297 = vmul.u32 %v292, %v293
    %v298 = vmul.u32 %v292, %v294
    %v299 = vshll.u32 %v296, 16
    %v300 = vshrl.u32 %v296, 16
    %v301 = vshll.u32 %v297, 16
    %v302 = vshrl.u32 %v297, 16
    %vm303 = vc.u32 %v295, %v299
    %v304 = vsel %vm303, 1, 0
    %v305 = vadd.s32 %v295, %v299
    %v306 = vadd.s32 %v298, %v304
    %vm307 = vc.u32 %v305, %v301
    %v308 = vsel %vm307, 1, 0
    %v309 = vadd.s32 %v305, %v301
    %v310 = vadd.s32 %v306, %v308
    %v311 = vadd.s32 %v310, %v300
    %v312 = vadd.s32 %v311, %v302
    %v313 = vmul.u32 %v268, %v259
    %v314 = vadd.s32 %v290, %v309
    %vm315 = vc.u32 %v290, %v309
    %v316 = vadd.s32 %v312, 1
    %v317 = vsel %vm315, %v316, %v312
    %v318 = vadd.s32 %v313, %v317
    %v319 = vadd.s32 %v318, 536870912
    %v320 = vshrl.u32 %v319, 30
    %v321 = vshll.u32 %v320, 30
    %v322 = vsub.s32 %v318, %v321
    %vm323 = vcmp.lt.s32.totalorder %v322, 0
    %v324 = vsub.s32 0, %v322
    %v325 = vsel %vm323, %v324, %v322
    %v326 = vclz %v325
    %v327 = vsub.s32 %v326, 2
    %vm328 = vcmp.gt.s32.totalorder 0, %v327
    %v329 = vsel %vm328, 0, %v327
    %v330 = vsub.s32 32, %v329
    %v331 = vshll.u32 %v322, %v329
    %v332 = vshrl.u32 %v314, %v330
    %v333 = vor.u32 %v331, %v332
    %v334 = vsub.s32 4294967266, %v329
    %v335 = vadd.s32 %v334, 127
    %v336 = vshll.u32 %v335, 23
    %v337 = vor.u32 4788187, %v336
    %v338 = vand.u32 2147483647, %v337
    %v340 = vcvt.s32.f32 %v333
    %v341 = vmul.f32 %v340, %v338
    %v342 = vxor.u32 %v341, 2147483648
    %v343 = vsel %vm222, %v342, %v341
    %v344 = vsub.s32 4, %v320
    %v345 = vsel %vm222, %v344, %v320
    %v346 = vsel %vm221, %v49, %v343
    %v347 = vsel %vm221, 0, %v345
    %v348 = vmul.f32 %v346, %v346
    %v349 = vmul.f32 %v348, -0.001358992
    %v350 = vadd.f32 %v349, 0.041655596
    %v351 = vmul.f32 %v348, %v350
    %v352 = vadd.f32 %v351, -0.4999988
    %v353 = vmul.f32 %v348, %v352
    %v354 = vadd.f32 1.0, %v353
    %v355 = vmul.f32 %v346, %v346
    %v356 = vmul.f32 %v355, -0.00019511016
    %v357 = vadd.f32 %v356, 0.008332121
    %v358 = vmul.f32 %v355, %v357
    %v359 = vadd.f32 %v358, -0.16666654
    %v360 = vmul.f32 %v355, %v359
    %v361 = vadd.f32 %v360, 1.0
    %v362 = vmul.f32 %v361, %v346
    %vm363 = vweird.f32 %v49
    %v364 = vand.u32 %v347, 3
    %vm365 = vcmp.lt.s32.totalorder %v364, 2
    %vm366 = vcmp.eq.s32.totalorder %v364, 0
    %v367 = vxor.u32 %v362, 2147483648
    %v368 = vsel %vm366, %v354, %v367
    %vm369 = vcmp.eq.s32.totalorder %v364, 2
    %v370 = vxor.u32 %v354, 2147483648
    %v371 = vsel %vm369, %v370, %v362
    %v372 = vsel %vm365, %v368, %v371
    %v373 = vsel %vm363, nan, %v372
    %v374 = vsub.f32 1.0, %v373
    %v375 = vrcp.pop %v36
    %v376 = vmul.f32 %v36, %v375
    %v377 = vsub.f32 1.0, %v376
    %v378 = vmul.f32 %v375, %v377
    %v379 = vadd.f32 %v375, %v378
    %vm380 = vweird.f32 %v36
    %vm381 = vweird.f32 %v375
    %vm382 = vmor %vm380, %vm381
    %v383 = vsel %vm382, %v375, %v379
    %v384 = vand.u32 2147483647, %v36
    %vm385 = vcmp.eq.f32.partialorder %v384, 8.507059e+37
    %v386 = vand.u32 %v36, 2147483648
    %v387 = vor.u32 1.1754944e-38, %v386
    %v388 = vsel %vm385, %v387, %v383
    %v389 = vmul.f32 %v374, %v388
    %s390 = ssub.f32 %s28, %s32
    %v391 = vstv %s390
    %v392 = vmul.f32 %v389, %v391
    %v393 = vadd.f32 %v392, 1.0
    %394 = vst [vmem:[#allocation5] sm:$0x1] %v393
    %s395 = ssub.f32 0.0, %s27
    %v396 = vstv %s395
    %v397 = vmul.f32 %v219, %v396
    %s398 = smul.f32 %s25, %s26
    %v399 = vstv %s398
    %v400 = vmul.f32 %v389, %v399
    %v401 = vadd.f32 %v397, %v400
    %402 = vst [vmem:[#allocation5 + $0x1] sm:$0x1] %v401
    %v403 = vstv %s26
    %v404 = vmul.f32 %v219, %v403
    %s405 = smul.f32 %s25, %s27
    %v406 = vstv %s405
    %v407 = vmul.f32 %v389, %v406
    %v408 = vadd.f32 %v404, %v407
    %409 = vst [vmem:[#allocation5 + $0x2] sm:$0x1] %v408
    %410 = vst [vmem:[#allocation5 + $0x3] sm:$0x1] 0.0
    %v411 = vstv %s27
    %v412 = vmul.f32 %v219, %v411
    %v413 = vadd.f32 %v412, %v400
    %414 = vst [vmem:[#allocation5 + $0x4] sm:$0x1] %v413
    %s415 = ssub.f32 %s29, %s32
    %v416 = vstv %s415
    %v417 = vmul.f32 %v389, %v416
    %v418 = vadd.f32 %v417, 1.0
    %419 = vst [vmem:[#allocation5 + $0x5] sm:$0x1] %v418
    %s420 = ssub.f32 0.0, %s25
    %v421 = vstv %s420
    %v422 = vmul.f32 %v219, %v421
    %s423 = smul.f32 %s26, %s27
    %v424 = vstv %s423
    %v425 = vmul.f32 %v389, %v424
    %v426 = vadd.f32 %v422, %v425
    %427 = vst [vmem:[#allocation5 + $0x6] sm:$0x1] %v426
    %428 = vst [vmem:[#allocation5 + $0x7] sm:$0x1] 0.0
    %s429 = ssub.f32 0.0, %s26
    %v430 = vstv %s429
    %v431 = vmul.f32 %v219, %v430
    %v432 = vadd.f32 %v431, %v407
    %433 = vst [vmem:[#allocation5 + $0x8] sm:$0x1] %v432
    %v434 = vstv %s25
    %v435 = vmul.f32 %v219, %v434
    %v436 = vadd.f32 %v435, %v425
    %437 = vst [vmem:[#allocation5 + $0x9] sm:$0x1] %v436
    %s438 = ssub.f32 %s31, %s32
    %v439 = vstv %s438
    %v440 = vmul.f32 %v389, %v439
    %v441 = vadd.f32 %v440, 1.0
    %442 = vst [vmem:[#allocation5 + $0xa] sm:$0x1] %v441
    %443 = vst [vmem:[#allocation5 + $0xb] sm:$0x1] 0.0
    %444 = vst [vmem:[#allocation5 + $0xc] sm:$0x1] 0.0
    %445 = vst [vmem:[#allocation5 + $0xd] sm:$0x1] 0.0
    %446 = vst [vmem:[#allocation5 + $0xe] sm:$0x1] 0.0
    %447 = vst [vmem:[#allocation5 + $0xf] sm:$0x1] 1.0
    // Predicated region
    $region14: #{rjoint_forward.1} parent=1 // pred_check
      _
    $region15: #{rjoint_forward.1} parent=1 // pred_check_branch
      %449 = sbr.rel (0) target = $region17
    $region16: #{rjoint_forward.1} parent=1 // pred_region
      %451 = vsyncadd [#allocation3], 0
      %s452 = sshll.u32 [#allocation5], 4
      %s453 = int_to_ptr.vmem [resolvable:$true] %s452
      %s454 = sshll.u32 %s2, 4
      %s455 = int_to_ptr.hbm [resolvable:$true] %s454
      %460 = dma.vmem_to_hbm [thread:$0]  %s453, 256, %s455, [#allocation3], 128, 128, 8
    $region17: #{rjoint_forward.1} parent=1 // pred_fallthru
      _
    // Predicated region
    $region18: #{rjoint_forward.1} parent=1 // pred_check
      _
    $region19: #{rjoint_forward.1} parent=1 // pred_check_branch
      %462 = sbr.rel (0) target = $region21
    $region20: #{rjoint_forward.1} parent=1 // pred_region
      %464 = dma.done [#allocation3], 256
    $region21: #{rjoint_forward.1} parent=1 // pred_fallthru
      _
    %465 = vsyncpa [#allocation3], 1
    %466 = vsyncpa [#allocation4], 1

</llo_original>
